<compile_context>
chip_gen: v7x
topology: tpu7x:2x2x1
jax: 0.10.0
libtpu: 0.0.40
codegen_flags: <defaults>
</compile_context>

<pallas_src>
import jax
import jax.numpy as jnp
from jax.experimental import pallas as pl
from jax.experimental.pallas import tpu as pltpu


# ----------------------------------------------------------------------------
# Kernels
# ----------------------------------------------------------------------------
def _onehot_matmul_kernel(idx_ref, w_ref, out_ref):
    """Small/medium vocab path: out = onehot(idx) @ W with W = ff @ lf.

    idx_ref: (TB, 1) int32   -- token ids for this block (VMEM)
    w_ref  : (V, D)  float   -- precomputed first_factor @ last_factor (VMEM)
    out_ref: (TB, D) float
    """
    ids = idx_ref[...]                                            # (TB, 1)
    tb = out_ref.shape[0]
    v = w_ref.shape[0]
    col = jax.lax.broadcasted_iota(jnp.int32, (tb, v), 1)
    onehot = (ids == col).astype(w_ref.dtype)                     # exact row selector
    res = jnp.dot(onehot, w_ref[...],
                  preferred_element_type=jnp.float32)             # (TB, D) on MXU, K=V
    out_ref[...] = res.astype(out_ref.dtype)


def _streaming_onehot_kernel(idx_ref, ff_ref, lf_ref, out_ref, acc_ref):
    """Large vocab path: first_factor streamed in (VB, R) tiles over grid axis 1.

    idx_ref: (TB, 1) int32   -- token ids (revisited across vocab blocks)
    ff_ref : (VB, R) float   -- current vocab-block of first_factor
    lf_ref : (R, D)  float   -- last_factor (whole, small)
    out_ref: (TB, D) float   -- written on the last vocab block
    acc_ref: (TB, R) f32     -- accumulated gathered rows (VMEM scratch)
    """
    vstep = pl.program_id(1)

    @pl.when(vstep == 0)
    def _init():
        acc_ref[...] = jnp.zeros_like(acc_ref)

    tb = acc_ref.shape[0]
    vb = ff_ref.shape[0]
    ids = idx_ref[...]                                            # (TB, 1)
    col = jax.lax.broadcasted_iota(jnp.int32, (tb, vb), 1) + vstep * vb
    onehot = (ids == col).astype(ff_ref.dtype)                    # (TB, VB)
    acc_ref[...] += jnp.dot(onehot, ff_ref[...],
                            preferred_element_type=jnp.float32)   # += gathered rows

    @pl.when(vstep == pl.num_programs(1) - 1)
    def _finalize():
        res = jnp.dot(acc_ref[...], lf_ref[...].astype(jnp.float32),
                      preferred_element_type=jnp.float32)         # (TB, D)
        out_ref[...] = res.astype(out_ref.dtype)


# ----------------------------------------------------------------------------
# Wrapper
# ----------------------------------------------------------------------------
def _round_up(x, m):
    return ((x + m - 1) // m) * m


def _vmem_limit_bytes(need_bytes):
    """Explicit scoped-VMEM budget, capped by the chip's physical capacity."""
    try:
        cap = int(pltpu.get_tpu_info().vmem_capacity_bytes)       # 64 MiB on v7x
    except Exception:
        cap = 64 * 1024 * 1024                                    # conservative fallback
    lo = 32 * 1024 * 1024
    hi = max(cap - 8 * 1024 * 1024, lo)                           # headroom for compiler scratch
    need = int(need_bytes) + (4 << 20)
    return int(min(max(need, lo), hi))


def svd_embedding_forward(x_idx, first_factor, last_factor, *,
                          token_block=512, onehot_max_vocab=4096,
                          vocab_block=2048):
    """Pallas implementation of SVDEmbedding.forward."""
    V, R = first_factor.shape
    R2, D = last_factor.shape
    assert R == R2
    orig_shape = x_idx.shape

    flat = x_idx.reshape(-1).astype(jnp.int32)
    n = flat.shape[0]

    tb = min(_round_up(token_block, 8), _round_up(max(n, 8), 8))
    n_pad = _round_up(n, tb)
    flat = jnp.pad(flat, (0, n_pad - n))                          # pad tokens use id 0
    idx_col = flat.reshape(n_pad, 1)
    grid_t = n_pad // tb

    out_dtype = first_factor.dtype
    itemsize = jnp.dtype(first_factor.dtype).itemsize
    out_sds = jax.ShapeDtypeStruct((n_pad, D), out_dtype)

    if V <= onehot_max_vocab:
        # --- Path A: precompute W = ff @ lf (small), single one-hot matmul ---
        w = jnp.dot(first_factor.astype(jnp.float32),
                    last_factor.astype(jnp.float32),
                    preferred_element_type=jnp.float32).astype(first_factor.dtype)
        need = (2 * (tb * 4 + V * D * itemsize + tb * D * itemsize)
                + tb * V * itemsize + tb * D * 4)
        out = pl.pallas_call(
            _onehot_matmul_kernel,
            out_shape=out_sds,
            grid_spec=pltpu.PrefetchScalarGridSpec(
                num_scalar_prefetch=0,
                grid=(grid_t,),
                in_specs=[
                    pl.BlockSpec((tb, 1), lambda i: (i, 0)),      # token ids
                    pl.BlockSpec((V, D), lambda i: (0, 0)),       # W (whole, revisited)
                ],
                out_specs=pl.BlockSpec((tb, D), lambda i: (i, 0)),
            ),
            compiler_params=pltpu.CompilerParams(
                dimension_semantics=("parallel",),
                vmem_limit_bytes=_vmem_limit_bytes(need),
            ),
        )(idx_col, w)
    else:
        # --- Path B: stream first_factor in (vb, R) tiles; factored matmul ---
        vb = min(_round_up(vocab_block, 8), _round_up(V, 8))
        v_pad = _round_up(V, vb)
        ff = jnp.pad(first_factor, ((0, v_pad - V), (0, 0)))      # zero rows: OOB-safe
        grid_v = v_pad // vb
        need = (2 * (tb * 4 + vb * R * itemsize + R * D * itemsize + tb * D * itemsize)
                + tb * vb * itemsize + tb * R * 4 + tb * D * 4)
        out = pl.pallas_call(
            _streaming_onehot_kernel,
            out_shape=out_sds,
            grid_spec=pltpu.PrefetchScalarGridSpec(
                num_scalar_prefetch=0,
                grid=(grid_t, grid_v),                            # reduction axis last
                in_specs=[
                    pl.BlockSpec((tb, 1), lambda i, v: (i, 0)),   # token ids
                    pl.BlockSpec((vb, R), lambda i, v: (v, 0)),   # first_factor tile
                    pl.BlockSpec((R, D), lambda i, v: (0, 0)),    # last_factor (whole)
                ],
                out_specs=pl.BlockSpec((tb, D), lambda i, v: (i, 0)),
                scratch_shapes=[pltpu.VMEM((tb, R), jnp.float32)],
            ),
            compiler_params=pltpu.CompilerParams(
                dimension_semantics=("parallel", "arbitrary"),
                vmem_limit_bytes=_vmem_limit_bytes(need),
            ),
        )(idx_col, ff, last_factor)

    out = out[:n]
    return out.reshape(*orig_shape, D)


# ----------------------------------------------------------------------------
# Demo / self-check
# ----------------------------------------------------------------------------
def _xavier_uniform(key, shape, dtype=jnp.float32):
    fan_in, fan_out = shape[0], shape[1]
    bound = (6.0 / (fan_in + fan_out)) ** 0.5
    return jax.random.uniform(key, shape, dtype=dtype, minval=-bound, maxval=bound)


if __name__ == "__main__":
    key = jax.random.PRNGKey(0)
    keys = jax.random.split(key, 12)

    # ---- Case 1: tiny vocab -> precomputed-W one-hot path ----
    V1, D1, R1 = 64, 32, 8
    ff1 = _xavier_uniform(keys[0], (V1, R1))
    lf1 = _xavier_uniform(keys[1], (R1, D1))
    x1 = jax.random.randint(keys[2], (2, 8), 0, V1, dtype=jnp.int32)
    out1 = jax.block_until_ready(svd_embedding_forward(x1, ff1, lf1))
    ref1 = (ff1[x1.reshape(-1)] @ lf1).reshape(2, 8, D1)
    assert out1.shape == (2, 8, D1) and out1.dtype == jnp.float32
    assert jnp.allclose(out1, ref1, atol=1e-5, rtol=1e-5)

    # ---- Case 2: mid vocab (2048 <= 4096) -> one-hot path, MXU gather ----
    V2, D2, R2 = 2048, 32, 8
    ff2 = _xavier_uniform(keys[3], (V2, R2))
    lf2 = _xavier_uniform(keys[4], (R2, D2))
    x2 = jax.random.randint(keys[5], (4, 8), 0, V2, dtype=jnp.int32)
    out2 = jax.block_until_ready(svd_embedding_forward(x2, ff2, lf2))
    ref2 = (ff2[x2.reshape(-1)] @ lf2).reshape(4, 8, D2)
    assert out2.shape == (4, 8, D2) and out2.dtype == jnp.float32
    assert jnp.allclose(out2, ref2, atol=1e-5, rtol=1e-5)

    # ---- Case 3: large vocab -> streaming (vb, R) one-hot accumulation ----
    V3, D3, R3 = 8192, 32, 8
    ff3 = _xavier_uniform(keys[6], (V3, R3))
    lf3 = _xavier_uniform(keys[7], (R3, D3))
    x3 = jax.random.randint(keys[8], (2, 16), 0, V3, dtype=jnp.int32)
    out3 = jax.block_until_ready(svd_embedding_forward(x3, ff3, lf3))
    ref3 = (ff3[x3.reshape(-1)] @ lf3).reshape(2, 16, D3)
    assert out3.shape == (2, 16, D3) and out3.dtype == jnp.float32
    assert jnp.allclose(out3, ref3, atol=1e-5, rtol=1e-5)

    # ---- Case 4: bf16 factors (MXU-native, halved VMEM/HBM traffic) ----
    V4, D4, R4 = 2048, 32, 8
    ff4 = _xavier_uniform(keys[9], (V4, R4)).astype(jnp.bfloat16)
    lf4 = _xavier_uniform(keys[10], (R4, D4)).astype(jnp.bfloat16)
    x4 = jax.random.randint(keys[11], (2, 8), 0, V4, dtype=jnp.int32)
    out4 = jax.block_until_ready(svd_embedding_forward(x4, ff4, lf4))
    ref4 = (ff4.astype(jnp.float32)[x4.reshape(-1)] @ lf4.astype(jnp.float32)
            ).reshape(2, 8, D4)
    assert out4.shape == (2, 8, D4) and out4.dtype == jnp.bfloat16
    assert jnp.allclose(out4.astype(jnp.float32), ref4, atol=2e-2, rtol=2e-2)

    print("KERNEL_OK")
</pallas_src>

<mosaic_0001>
module attributes {stable_mosaic.version = 11 : i64} {
  func.func @_onehot_matmul_kernel(%arg0: i32, %arg1: memref<16x1xi32, #tpu.memory_space<vmem>>, %arg2: memref<64x32xf32, #tpu.memory_space<vmem>>, %arg3: memref<16x32xf32, #tpu.memory_space<vmem>>) attributes {dimension_semantics = [#tpu.dimension_semantics<parallel>], iteration_bounds = array<i64: 1>, scalar_prefetch = 0 : i64, scratch_operands = 0 : i64, tpu.core_type = #tpu.core_type<tc>, window_params = [{transform_indices = @transform_0, window_bounds = array<i64: 16, 1>}, {pipeline_mode = #tpu.pipeline_mode<synchronous>, transform_indices = @transform_1, window_bounds = array<i64: 64, 32>}, {transform_indices = @transform_2, window_bounds = array<i64: 16, 32>}]} {
    %c0 = arith.constant 0 : index
    %c0_0 = arith.constant 0 : index
    %0 = vector.load %arg1[%c0, %c0_0] : memref<16x1xi32, #tpu.memory_space<vmem>>, vector<16x1xi32>
    %1 = tpu.iota {dimensions = array<i32: 1>} : vector<16x64xi32>
    %2 = vector.broadcast %0 : vector<16x1xi32> to vector<16x64xi32>
    %3 = arith.cmpi eq, %2, %1 : vector<16x64xi32>
    %4 = arith.extui %3 : vector<16x64xi1> to vector<16x64xi32>
    %5 = arith.sitofp %4 : vector<16x64xi32> to vector<16x64xf32>
    %c0_1 = arith.constant 0 : index
    %c0_2 = arith.constant 0 : index
    %6 = vector.load %arg2[%c0_1, %c0_2] : memref<64x32xf32, #tpu.memory_space<vmem>>, vector<64x32xf32>
    %cst = arith.constant dense<0.000000e+00> : vector<16x32xf32>
    %7 = tpu.matmul %5, %6, %cst {dimension_numbers = #tpu.dot_dimension_numbers<[1], [0], [0], [1], [0, 0, 1, 1], [], []>} : vector<16x64xf32>, vector<64x32xf32>, vector<16x32xf32> -> vector<16x32xf32>
    %c0_3 = arith.constant 0 : index
    %c0_4 = arith.constant 0 : index
    %8 = vector.load %arg3[%c0_3, %c0_4] : memref<16x32xf32, #tpu.memory_space<vmem>>, vector<16x32xf32>
    tpu.vector_store %arg3[%c0_3, %c0_4], %7 {strides = array<i32>} : memref<16x32xf32, #tpu.memory_space<vmem>>, vector<16x32xf32>,
    return
  }
  func.func @transform_0(%arg0: i32) -> (i32, i32) {
    %c0_i32 = arith.constant 0 : i32
    %c0_i32_0 = arith.constant 0 : i32
    return %arg0, %c0_i32 : i32, i32
  }
  func.func @transform_1(%arg0: i32) -> (i32, i32) {
    %c0_i32 = arith.constant 0 : i32
    %c0_i32_0 = arith.constant 0 : i32
    %c0_i32_1 = arith.constant 0 : i32
    return %c0_i32, %c0_i32_0 : i32, i32
  }
  func.func @transform_2(%arg0: i32) -> (i32, i32) {
    %c0_i32 = arith.constant 0 : i32
    %c0_i32_0 = arith.constant 0 : i32
    return %arg0, %c0_i32 : i32, i32
  }
}

</mosaic_0001>

<llo_original>
// kernel: tpu_custom_call.1
$region0: #{tpu_custom_call.1}
  #allocation0 [shape = 'u32[]', space=smem, size = 0x4, offset = 0x4, fixed_abs, tag = 'smem constant byte address 0x4 - core index']
  #allocation1 [shape = 'u32[144,128]{1,0:T(1,128)}', space=vmem, size = 0x12000, scoped, tag = 'internal scratch']
  %s0 = inlined_call_operand.vmem [shape: s32[16,1], index: 0, kind: input, shape index: {}]
  %s1 = inlined_call_operand.vmem [shape: f32[64,32], index: 1, kind: input, shape index: {}]
  %s2 = inlined_call_operand.hbm [shape: f32[16,32], index: 2, kind: output, shape index: {}]
  %s3 = sld [smem:[#allocation0]]
  $region18: #{tpu_custom_call.1} parent=0
    _
  %s5 = ssub.s32 1, %s3
  %s6 = scalar_select 0, %s5, %s3
  $region1: #{tpu_custom_call.1} parent=0
    #allocation2 [shape = 'u8[8192]{0}', space=vmem, size = 0x2000, scoped, tag = 'output window, operand 0, single buffered']
    #allocation3 [shape = 's32[1]{0}', space=sflag, size = 0x4, scoped, tag = 'scoped memory for tpu_custom_call.1']
    %7 = vsyncpa [#allocation3], 0
    // Predicated region
    $region2: #{tpu_custom_call.1} parent=1 // pred_check
      _
    $region3: #{tpu_custom_call.1} parent=1 // pred_check_branch
      %9 = sbr.rel (0) target = $region5
    $region4: #{tpu_custom_call.1} parent=1 // pred_region
      _
    $region5: #{tpu_custom_call.1} parent=1 // pred_fallthru
      _
    // Predicated region
    $region6: #{tpu_custom_call.1} parent=1 // pred_check
      _
    $region7: #{tpu_custom_call.1} parent=1 // pred_check_branch
      %11 = sbr.rel (0) target = $region9
    $region8: #{tpu_custom_call.1} parent=1 // pred_region
      _
    $region9: #{tpu_custom_call.1} parent=1 // pred_fallthru
      _
    %v12 = vld [vmem:[%s0] sm:$0xff]
    %v13 = vld [vmem:[%s0 + $0x8] sm:$0xff]
    %v14 = vlaneseq
    %v15 = vand.u32 %v14, 127
    %16 = vset.pattern.permute.xlu0 0
    %17 = vperm.xlu0 %16, %v12
    %v18 = vpop.permute.xlu0 %17
    %19 = vset.pattern.permute.xlu0 0
    %20 = vperm.xlu0 %19, %v13
    %v21 = vpop.permute.xlu0 %20
    %vm22 = vcmp.eq.s32.totalorder %v18, %v15
    %vm23 = vcmp.eq.s32.totalorder %v21, %v15
    %v24 = vsel %vm22, 1, 0
    %v25 = vsel %vm23, 1, 0
    %v26 = vcvt.s32.f32 %v24
    %v27 = vcvt.s32.f32 %v25
    %v28 = vld [vmem:[%s1] sm:$0xff]
    %v29 = vld [vmem:[%s1 + $0x8] sm:$0xff]
    %v30 = vld [vmem:[%s1 + $0x10] sm:$0xff]
    %v31 = vld [vmem:[%s1 + $0x18] sm:$0xff]
    %v32 = vld [vmem:[%s1 + $0x20] sm:$0xff]
    %v33 = vld [vmem:[%s1 + $0x28] sm:$0xff]
    %v34 = vld [vmem:[%s1 + $0x30] sm:$0xff]
    %v35 = vld [vmem:[%s1 + $0x38] sm:$0xff]
    %vm36 = vcmask 523264
    %v38 = vsel %vm36, %v26, 0
    %v41 = vsel %vm36, %v27, 0
    %43 = vmatprep.subr.mxu0 0.0
    %44 = vmatpush1.msra.mxu0 %v28
    %45 = vmatprep.subr.mxu0 0.0
    %46 = vmatpush1.msra.mxu0 %v29
    %47 = vmatprep.subr.mxu0 0.0
    %48 = vmatpush1.msra.mxu0 %v30
    %49 = vmatprep.subr.mxu0 0.0
    %50 = vmatpush1.msra.mxu0 %v31
    %51 = vmatprep.subr.mxu0 0.0
    %52 = vmatpush1.msra.mxu0 %v32
    %53 = vmatprep.subr.mxu0 0.0
    %54 = vmatpush1.msra.mxu0 %v33
    %55 = vmatprep.subr.mxu0 0.0
    %56 = vmatpush1.msra.mxu0 %v34
    %57 = vmatprep.subr.mxu0 0.0
    %58 = vmatpush1.msra.mxu0 %v35
    %59 = vmatprep.subr.mxu0 0.0
    %60 = vmatpush1.msra.mxu0 0.0
    %61 = vmatprep.subr.mxu0 0.0
    %62 = vmatpush1.msra.mxu0 0.0
    %63 = vmatprep.subr.mxu0 0.0
    %64 = vmatpush1.msra.mxu0 0.0
    %65 = vmatprep.subr.mxu0 0.0
    %66 = vmatpush1.msra.mxu0 0.0
    %67 = vmatprep.subr.mxu0 0.0
    %68 = vmatpush1.msra.mxu0 0.0
    %69 = vmatprep.subr.mxu0 0.0
    %70 = vmatpush1.msra.mxu0 0.0
    %71 = vmatprep.subr.mxu0 0.0
    %72 = vmatpush1.msra.mxu0 0.0
    %73 = vmatprep.subr.mxu0 0.0
    %74 = vmatpush1.msra.mxu0 0.0
    %75 = vmatprep.subr.mxu0 0.0
    %76 = vmatpush1.msra.mxu0 0.0
    %77 = vmatprep.subr.mxu0 0.0
    %78 = vmatpush1.msra.mxu0 0.0
    %79 = vmatprep.subr.mxu0 0.0
    %80 = vmatpush1.msra.mxu0 0.0
    %81 = vmatprep.subr.mxu0 0.0
    %82 = vmatpush1.msra.mxu0 0.0
    %83 = vmatprep.subr.mxu0 0.0
    %84 = vmatpush1.msra.mxu0 0.0
    %85 = vmatprep.subr.mxu0 0.0
    %86 = vmatpush1.msra.mxu0 0.0
    %87 = vmatprep.subr.mxu0 0.0
    %88 = vmatpush1.msra.mxu0 0.0
    %89 = vmatprep.subr.mxu0 0.0
    %90 = vmatpush1.msra.mxu0 0.0
    %91 = vmatprep.subr.mxu0 0.0
    %92 = vmatpush1.msra.mxu0 0.0
    %93 = vmatprep.subr.mxu0 0.0
    %94 = vmatpush1.msra.mxu0 0.0
    %95 = vmatprep.subr.mxu0 0.0
    %96 = vmatpush1.msra.mxu0 0.0
    %97 = vmatprep.subr.mxu0 0.0
    %98 = vmatpush1.msra.mxu0 0.0
    %99 = vmatprep.subr.mxu0 0.0
    %100 = vmatpush1.msra.mxu0 0.0
    %101 = vmatprep.subr.mxu0 0.0
    %102 = vmatpush1.msra.mxu0 0.0
    %103 = vmatprep.subr.mxu0 0.0
    %104 = vmatpush1.msra.mxu0 0.0
    %105 = vmatprep.subr.mxu0 0.0
    %106 = vmatpush1.msra.mxu0 0.0
    %107 = vmatprep.mubr.f32.mxu0 0.0
    %108 = vmatmul.mubr.f32.gmra.mrb[0].mxu0 %v38
    %v109 = vpop.f32.mrb[0].mxu0
    %v110 = vadd.f32 0.0, %v109
    %v111 = vpop.f32.mrb[0].mxu0
    %112 = vmatprep.mubr.f32.mxu0 0.0
    %113 = vmatmul.mubr.f32.gmra.mrb[0].mxu0 %v41
    %v114 = vpop.f32.mrb[0].mxu0
    %v115 = vadd.f32 0.0, %v114
    %v116 = vpop.f32.mrb[0].mxu0
    %117 = vdwg.mxu0
    %vm118 = vcmask 261120
    %119 = vst.msk [vmem:[#allocation2] sm:$0xff] %vm118, %v110
    %120 = vst.msk [vmem:[#allocation2 + $0x8] sm:$0xff] %vm118, %v115
    // Predicated region
    $region10: #{tpu_custom_call.1} parent=1 // pred_check
      _
    $region11: #{tpu_custom_call.1} parent=1 // pred_check_branch
      %122 = sbr.rel (0) target = $region13
    $region12: #{tpu_custom_call.1} parent=1 // pred_region
      %s124 = ssub.s32 256, 256
      %125 = vsyncadd [#allocation3], %s124
      %s126 = sshll.u32 [#allocation2], 4
      %s127 = int_to_ptr.vmem [resolvable:$true] %s126
      %132 = dma.vmem_to_hbm [thread:$0]  %s127, 256, %s2, [#allocation3], 128, 128, 8
    $region13: #{tpu_custom_call.1} parent=1 // pred_fallthru
      _
    // Predicated region
    $region14: #{tpu_custom_call.1} parent=1 // pred_check
      _
    $region15: #{tpu_custom_call.1} parent=1 // pred_check_branch
      %134 = sbr.rel (0) target = $region17
    $region16: #{tpu_custom_call.1} parent=1 // pred_region
      %135 = dma.done [#allocation3], 256
    $region17: #{tpu_custom_call.1} parent=1 // pred_fallthru
      _
    %136 = vsyncpa [#allocation3], 1

</llo_original>
